<compile_context>
chip_gen: v6e
topology: v6e:2x2x1
jax: 0.10.0
libtpu: 0.0.40
codegen_flags: <defaults>
</compile_context>

<pallas_src>
import functools

import jax
import jax.numpy as jnp
from jax.experimental import pallas as pl
from jax.experimental.pallas import tpu as pltpu


def _round_up(x, m):
    return (x + m - 1) // m * m


def text_sentiment_kernel(text_sref, bag_sref, emb_ref, w_ref, b_ref, inv_ref,
                          out_ref, acc_ref, *, b_pad, tok_block):
    """One grid step per TOK_BLOCK tokens.

    text_sref : SMEM (T_pad,)        int32  token ids (scalar prefetch)
    bag_sref  : SMEM (T_pad,)        int32  bag id per token (scalar prefetch)
    emb_ref   : VMEM (V, D_pad)      f32    embedding table, resident (const block idx)
    w_ref     : VMEM (D_pad, C_pad)  f32    fc weight (transposed, padded), resident
    b_ref     : VMEM (1, C_pad)      f32    fc bias (padded), resident
    inv_ref   : VMEM (B_pad, 1)      f32    exact per-bag 1/count (0 for empty bags)
    out_ref   : VMEM (B_pad, C_pad)  f32    padded logits (written only at last step)
    acc_ref   : VMEM (B_pad, D_pad)  f32    per-bag running sums (scratch)
    """
    step = pl.program_id(0)

    @pl.when(step == 0)
    def _init():
        acc_ref[...] = jnp.zeros_like(acc_ref)

    base = step * tok_block

    def body(i, carry):
        t = base + i
        tok = text_sref[t]                       # scalar SMEM read
        bag = bag_sref[t]                        # scalar SMEM read (no O(B) search)
        row = emb_ref[pl.ds(tok, 1), :]          # (1, D_pad) gather from resident table
        if b_pad <= 8:
            # One vreg of sublanes: select-broadcast accumulate is a single VPU op.
            sel = (jax.lax.broadcasted_iota(jnp.int32, (b_pad, 1), 0) == bag
                   ).astype(jnp.float32)         # (B_pad, 1)
            acc_ref[...] += sel * row            # (B_pad,1)*(1,D_pad) -> (B_pad,D_pad)
        else:
            # O(D) per token regardless of batch size.
            acc_ref[pl.ds(bag, 1), :] += row
        return carry

    jax.lax.fori_loop(0, tok_block, body, 0, unroll=True)

    # Finalize: mean pool (exact host-side reciprocals) + fc, once, at last step.
    @pl.when(step == pl.num_programs(0) - 1)
    def _finalize():
        pooled = acc_ref[...] * inv_ref[...]                       # (B_pad, D_pad)
        out_ref[...] = (
            jnp.dot(pooled, w_ref[...], preferred_element_type=jnp.float32)
            + b_ref[...])


def text_sentiment_forward(text, offsets, emb_weight, fc_weight, fc_bias,
                           *, tok_block=8):
    """text: (T,) int32, offsets: (B,) int32 (sorted, offsets[0]==0),
    emb_weight: (V, D), fc_weight: (C, D) (PyTorch layout), fc_bias: (C,).
    Returns (B, C) float32 logits identical to the PyTorch module."""
    T = int(text.shape[0])
    B = int(offsets.shape[0])
    V, D = emb_weight.shape
    C = fc_weight.shape[0]

    D_pad = _round_up(max(D, 128), 128)     # full-lane embedding rows
    C_pad = _round_up(max(C, 128), 128)     # lane-dense output
    B_pad = _round_up(B + 1, 8)             # +1 guarantees a sink row for pad tokens
    T_pad = _round_up(max(T, tok_block), tok_block)

    # Resident-table fast path only (table must fit VMEM; ~45 MiB is v7x-safe).
    table_bytes = V * D_pad * 4
    assert table_bytes <= 45 * (1 << 20), "embedding table too large for VMEM"
    # TODO(synk): for vocab tables > ~45 MiB, add an HBM row-gather path with
    # manual double-buffered DMAs (memory_space=pl.ANY + make_async_copy).
    # TODO(synk): for corpus-scale T, chunk token ids over an outer grid axis
    # instead of scalar-prefetching the full (T,) stream into SMEM.

    f32 = jnp.float32
    emb_p = jnp.zeros((V, D_pad), f32).at[:, :D].set(emb_weight.astype(f32))
    w_t = jnp.zeros((D_pad, C_pad), f32).at[:D, :C].set(fc_weight.astype(f32).T)
    b_p = jnp.zeros((1, C_pad), f32).at[:, :C].set(fc_bias.astype(f32).reshape(1, C))

    offs = offsets.astype(jnp.int32)
    # Clamp ids: PyTorch errors on out-of-range ids; clamping avoids OOB access.
    text_ids = jnp.clip(text.astype(jnp.int32), 0, V - 1)

    # Per-token bag ids (host-side searchsorted); tokens before offsets[0] -> bag 0.
    bag_ids = jnp.clip(
        jnp.searchsorted(offs, jnp.arange(T, dtype=jnp.int32),
                         side="right").astype(jnp.int32) - 1,
        0, B - 1)

    # Pad the token stream to a TOK_BLOCK multiple; padding tokens gather row 0
    # and accumulate into sink row B (< B_pad), which is never read back.
    pad = T_pad - T
    text_ids = jnp.concatenate([text_ids, jnp.zeros((pad,), jnp.int32)])
    bag_ids = jnp.concatenate([bag_ids, jnp.full((pad,), B, jnp.int32)])

    # Exact per-bag inverse counts; empty bags -> 0 (EmbeddingBag(mean) zero-fill).
    counts = jnp.diff(jnp.concatenate([offs, jnp.array([T], jnp.int32)])).astype(f32)
    inv = jnp.where(counts > 0, 1.0 / counts, 0.0)
    inv_p = jnp.zeros((B_pad, 1), f32).at[:B, 0].set(inv)

    resident_bytes = (V * D_pad + D_pad * C_pad + C_pad + B_pad
                      + B_pad * C_pad + B_pad * D_pad) * 4
    vmem_limit = int(min(100 << 20, max(32 << 20, 2 * resident_bytes + (4 << 20))))

    kernel = functools.partial(text_sentiment_kernel,
                               b_pad=B_pad, tok_block=tok_block)

    grid_spec = pltpu.PrefetchScalarGridSpec(
        num_scalar_prefetch=2,                      # token ids + bag ids -> SMEM
        grid=(T_pad // tok_block,),                 # TOK_BLOCK tokens per step
        in_specs=[
            # Constant block index -> each array DMA'd once, VMEM-resident.
            pl.BlockSpec((V, D_pad), lambda s, txt, bags: (0, 0)),      # emb table
            pl.BlockSpec((D_pad, C_pad), lambda s, txt, bags: (0, 0)),  # fc weight^T
            pl.BlockSpec((1, C_pad), lambda s, txt, bags: (0, 0)),      # fc bias
            pl.BlockSpec((B_pad, 1), lambda s, txt, bags: (0, 0)),      # 1/counts
        ],
        out_specs=pl.BlockSpec((B_pad, C_pad), lambda s, txt, bags: (0, 0)),
        scratch_shapes=[pltpu.VMEM((B_pad, D_pad), jnp.float32)],       # bag sums
    )

    out_padded = pl.pallas_call(
        kernel,
        grid_spec=grid_spec,
        out_shape=jax.ShapeDtypeStruct((B_pad, C_pad), jnp.float32),
        compiler_params=pltpu.CompilerParams(
            # token-block axis carries the accumulator -> reduction semantics
            dimension_semantics=("arbitrary",),
            vmem_limit_bytes=vmem_limit),
    )(text_ids, bag_ids, emb_p, w_t, b_p, inv_p)

    return out_padded[:B, :C]


if __name__ == "__main__":
    # Small shapes consistent with the module: vocab=64, embed_dim=32, num_class=4
    VOCAB, EMBED_DIM, NUM_CLASS = 64, 32, 4
    T, B = 8, 2   # 8 tokens total, 2 bags

    key = jax.random.PRNGKey(0)
    k_emb, k_fc, k_text = jax.random.split(key, 3)

    # init_weights(): uniform(-0.5, 0.5) for embedding & fc weight, zero bias
    emb_weight = jax.random.uniform(k_emb, (VOCAB, EMBED_DIM),
                                    minval=-0.5, maxval=0.5, dtype=jnp.float32)
    fc_weight = jax.random.uniform(k_fc, (NUM_CLASS, EMBED_DIM),
                                   minval=-0.5, maxval=0.5, dtype=jnp.float32)
    fc_bias = jnp.zeros((NUM_CLASS,), dtype=jnp.float32)

    text = jax.random.randint(k_text, (T,), 0, VOCAB, dtype=jnp.int32)
    offsets = jnp.array([0, 3], dtype=jnp.int32)  # bag0 = tokens[0:3], bag1 = tokens[3:8]

    out = text_sentiment_forward(text, offsets, emb_weight, fc_weight, fc_bias)
    out = jax.block_until_ready(out)

    # Pure-JAX reference (EmbeddingBag mean + Linear)
    gathered = emb_weight[text]                                   # (T, D)
    pooled = jnp.stack([gathered[0:3].mean(0), gathered[3:8].mean(0)])
    ref = pooled @ fc_weight.T + fc_bias
    assert out.shape == (B, NUM_CLASS)
    assert jnp.allclose(out, ref, atol=1e-4, rtol=1e-4), (out, ref)

    print("KERNEL_OK")
</pallas_src>

<mosaic_0001>
module attributes {stable_mosaic.version = 11 : i64} {
  func.func @text_sentiment_kernel(%arg0: i32, %arg1: memref<8xi32, #tpu.memory_space<smem>>, %arg2: memref<8xi32, #tpu.memory_space<smem>>, %arg3: memref<64x128xf32, #tpu.memory_space<vmem>>, %arg4: memref<128x128xf32, #tpu.memory_space<vmem>>, %arg5: memref<1x128xf32, #tpu.memory_space<vmem>>, %arg6: memref<8x1xf32, #tpu.memory_space<vmem>>, %arg7: memref<8x128xf32, #tpu.memory_space<vmem>>, %arg8: memref<8x128xf32, #tpu.memory_space<vmem>>) attributes {dimension_semantics = [#tpu.dimension_semantics<arbitrary>], iteration_bounds = array<i64: 1>, scalar_prefetch = 2 : i64, scratch_operands = 1 : i64, tpu.core_type = #tpu.core_type<tc>, window_params = [{pipeline_mode = #tpu.pipeline_mode<synchronous>, transform_indices = @transform_0, window_bounds = array<i64: 64, 128>}, {pipeline_mode = #tpu.pipeline_mode<synchronous>, transform_indices = @transform_1, window_bounds = array<i64: 128, 128>}, {pipeline_mode = #tpu.pipeline_mode<synchronous>, transform_indices = @transform_2, window_bounds = array<i64: 1, 128>}, {pipeline_mode = #tpu.pipeline_mode<synchronous>, transform_indices = @transform_3, window_bounds = array<i64: 8, 1>}, {pipeline_mode = #tpu.pipeline_mode<synchronous>, transform_indices = @transform_4, window_bounds = array<i64: 8, 128>}]} {
    %c0_i32 = arith.constant 0 : i32
    %0 = arith.cmpi eq, %arg0, %c0_i32 : i32
    %1 = arith.extui %0 : i1 to i32
    %c0_i32_0 = arith.constant 0 : i32
    %2 = arith.cmpi ne, %1, %c0_i32_0 : i32
    scf.if %2 {
      %cst = arith.constant 0.000000e+00 : f32
      %151 = vector.broadcast %cst : f32 to vector<8x128xf32>
      %c0_44 = arith.constant 0 : index
      %c0_45 = arith.constant 0 : index
      %152 = vector.load %arg8[%c0_44, %c0_45] : memref<8x128xf32, #tpu.memory_space<vmem>>, vector<8x128xf32>
      tpu.vector_store %arg8[%c0_44, %c0_45], %151 {strides = array<i32>} : memref<8x128xf32, #tpu.memory_space<vmem>>, vector<8x128xf32>,
    } else {
    }
    %c8_i32 = arith.constant 8 : i32
    %3 = arith.muli %arg0, %c8_i32 : i32
    %c0_i32_1 = arith.constant 0 : i32
    %4 = arith.addi %3, %c0_i32_1 : i32
    %5 = arith.index_cast %4 : i32 to index
    %6 = memref.load %arg1[%5] : memref<8xi32, #tpu.memory_space<smem>>
    %7 = arith.index_cast %4 : i32 to index
    %8 = memref.load %arg2[%7] : memref<8xi32, #tpu.memory_space<smem>>
    %9 = arith.index_cast %6 : i32 to index
    %c0 = arith.constant 0 : index
    %10 = vector.load %arg3[%9, %c0] : memref<64x128xf32, #tpu.memory_space<vmem>>, vector<1x128xf32>
    %11 = tpu.iota {dimensions = array<i32: 0>} : vector<8x1xi32>
    %12 = vector.broadcast %8 : i32 to vector<8x1xi32>
    %13 = arith.cmpi eq, %11, %12 : vector<8x1xi32>
    %14 = arith.extui %13 : vector<8x1xi1> to vector<8x1xi32>
    %15 = arith.sitofp %14 : vector<8x1xi32> to vector<8x1xf32>
    %c0_2 = arith.constant 0 : index
    %c0_3 = arith.constant 0 : index
    %16 = vector.load %arg8[%c0_2, %c0_3] : memref<8x128xf32, #tpu.memory_space<vmem>>, vector<8x128xf32>
    %17 = vector.broadcast %15 : vector<8x1xf32> to vector<8x128xf32>
    %18 = vector.broadcast %10 : vector<1x128xf32> to vector<8x128xf32>
    %19 = arith.mulf %17, %18 : vector<8x128xf32>
    %20 = arith.addf %16, %19 : vector<8x128xf32>
    %c0_4 = arith.constant 0 : index
    %c0_5 = arith.constant 0 : index
    %21 = vector.load %arg8[%c0_4, %c0_5] : memref<8x128xf32, #tpu.memory_space<vmem>>, vector<8x128xf32>
    tpu.vector_store %arg8[%c0_4, %c0_5], %20 {strides = array<i32>} : memref<8x128xf32, #tpu.memory_space<vmem>>, vector<8x128xf32>,
    %c1_i32 = arith.constant 1 : i32
    %22 = arith.addi %3, %c1_i32 : i32
    %23 = arith.index_cast %22 : i32 to index
    %24 = memref.load %arg1[%23] : memref<8xi32, #tpu.memory_space<smem>>
    %25 = arith.index_cast %22 : i32 to index
    %26 = memref.load %arg2[%25] : memref<8xi32, #tpu.memory_space<smem>>
    %27 = arith.index_cast %24 : i32 to index
    %c0_6 = arith.constant 0 : index
    %28 = vector.load %arg3[%27, %c0_6] : memref<64x128xf32, #tpu.memory_space<vmem>>, vector<1x128xf32>
    %29 = tpu.iota {dimensions = array<i32: 0>} : vector<8x1xi32>
    %30 = vector.broadcast %26 : i32 to vector<8x1xi32>
    %31 = arith.cmpi eq, %29, %30 : vector<8x1xi32>
    %32 = arith.extui %31 : vector<8x1xi1> to vector<8x1xi32>
    %33 = arith.sitofp %32 : vector<8x1xi32> to vector<8x1xf32>
    %c0_7 = arith.constant 0 : index
    %c0_8 = arith.constant 0 : index
    %34 = vector.load %arg8[%c0_7, %c0_8] : memref<8x128xf32, #tpu.memory_space<vmem>>, vector<8x128xf32>
    %35 = vector.broadcast %33 : vector<8x1xf32> to vector<8x128xf32>
    %36 = vector.broadcast %28 : vector<1x128xf32> to vector<8x128xf32>
    %37 = arith.mulf %35, %36 : vector<8x128xf32>
    %38 = arith.addf %34, %37 : vector<8x128xf32>
    %c0_9 = arith.constant 0 : index
    %c0_10 = arith.constant 0 : index
    %39 = vector.load %arg8[%c0_9, %c0_10] : memref<8x128xf32, #tpu.memory_space<vmem>>, vector<8x128xf32>
    tpu.vector_store %arg8[%c0_9, %c0_10], %38 {strides = array<i32>} : memref<8x128xf32, #tpu.memory_space<vmem>>, vector<8x128xf32>,
    %c2_i32 = arith.constant 2 : i32
    %40 = arith.addi %3, %c2_i32 : i32
    %41 = arith.index_cast %40 : i32 to index
    %42 = memref.load %arg1[%41] : memref<8xi32, #tpu.memory_space<smem>>
    %43 = arith.index_cast %40 : i32 to index
    %44 = memref.load %arg2[%43] : memref<8xi32, #tpu.memory_space<smem>>
    %45 = arith.index_cast %42 : i32 to index
    %c0_11 = arith.constant 0 : index
    %46 = vector.load %arg3[%45, %c0_11] : memref<64x128xf32, #tpu.memory_space<vmem>>, vector<1x128xf32>
    %47 = tpu.iota {dimensions = array<i32: 0>} : vector<8x1xi32>
    %48 = vector.broadcast %44 : i32 to vector<8x1xi32>
    %49 = arith.cmpi eq, %47, %48 : vector<8x1xi32>
    %50 = arith.extui %49 : vector<8x1xi1> to vector<8x1xi32>
    %51 = arith.sitofp %50 : vector<8x1xi32> to vector<8x1xf32>
    %c0_12 = arith.constant 0 : index
    %c0_13 = arith.constant 0 : index
    %52 = vector.load %arg8[%c0_12, %c0_13] : memref<8x128xf32, #tpu.memory_space<vmem>>, vector<8x128xf32>
    %53 = vector.broadcast %51 : vector<8x1xf32> to vector<8x128xf32>
    %54 = vector.broadcast %46 : vector<1x128xf32> to vector<8x128xf32>
    %55 = arith.mulf %53, %54 : vector<8x128xf32>
    %56 = arith.addf %52, %55 : vector<8x128xf32>
    %c0_14 = arith.constant 0 : index
    %c0_15 = arith.constant 0 : index
    %57 = vector.load %arg8[%c0_14, %c0_15] : memref<8x128xf32, #tpu.memory_space<vmem>>, vector<8x128xf32>
    tpu.vector_store %arg8[%c0_14, %c0_15], %56 {strides = array<i32>} : memref<8x128xf32, #tpu.memory_space<vmem>>, vector<8x128xf32>,
    %c3_i32 = arith.constant 3 : i32
    %58 = arith.addi %3, %c3_i32 : i32
    %59 = arith.index_cast %58 : i32 to index
    %60 = memref.load %arg1[%59] : memref<8xi32, #tpu.memory_space<smem>>
    %61 = arith.index_cast %58 : i32 to index
    %62 = memref.load %arg2[%61] : memref<8xi32, #tpu.memory_space<smem>>
    %63 = arith.index_cast %60 : i32 to index
    %c0_16 = arith.constant 0 : index
    %64 = vector.load %arg3[%63, %c0_16] : memref<64x128xf32, #tpu.memory_space<vmem>>, vector<1x128xf32>
    %65 = tpu.iota {dimensions = array<i32: 0>} : vector<8x1xi32>
    %66 = vector.broadcast %62 : i32 to vector<8x1xi32>
    %67 = arith.cmpi eq, %65, %66 : vector<8x1xi32>
    %68 = arith.extui %67 : vector<8x1xi1> to vector<8x1xi32>
    %69 = arith.sitofp %68 : vector<8x1xi32> to vector<8x1xf32>
    %c0_17 = arith.constant 0 : index
    %c0_18 = arith.constant 0 : index
    %70 = vector.load %arg8[%c0_17, %c0_18] : memref<8x128xf32, #tpu.memory_space<vmem>>, vector<8x128xf32>
    %71 = vector.broadcast %69 : vector<8x1xf32> to vector<8x128xf32>
    %72 = vector.broadcast %64 : vector<1x128xf32> to vector<8x128xf32>
    %73 = arith.mulf %71, %72 : vector<8x128xf32>
    %74 = arith.addf %70, %73 : vector<8x128xf32>
    %c0_19 = arith.constant 0 : index
    %c0_20 = arith.constant 0 : index
    %75 = vector.load %arg8[%c0_19, %c0_20] : memref<8x128xf32, #tpu.memory_space<vmem>>, vector<8x128xf32>
    tpu.vector_store %arg8[%c0_19, %c0_20], %74 {strides = array<i32>} : memref<8x128xf32, #tpu.memory_space<vmem>>, vector<8x128xf32>,
    %c4_i32 = arith.constant 4 : i32
    %76 = arith.addi %3, %c4_i32 : i32
    %77 = arith.index_cast %76 : i32 to index
    %78 = memref.load %arg1[%77] : memref<8xi32, #tpu.memory_space<smem>>
    %79 = arith.index_cast %76 : i32 to index
    %80 = memref.load %arg2[%79] : memref<8xi32, #tpu.memory_space<smem>>
    %81 = arith.index_cast %78 : i32 to index
    %c0_21 = arith.constant 0 : index
    %82 = vector.load %arg3[%81, %c0_21] : memref<64x128xf32, #tpu.memory_space<vmem>>, vector<1x128xf32>
    %83 = tpu.iota {dimensions = array<i32: 0>} : vector<8x1xi32>
    %84 = vector.broadcast %80 : i32 to vector<8x1xi32>
    %85 = arith.cmpi eq, %83, %84 : vector<8x1xi32>
    %86 = arith.extui %85 : vector<8x1xi1> to vector<8x1xi32>
    %87 = arith.sitofp %86 : vector<8x1xi32> to vector<8x1xf32>
    %c0_22 = arith.constant 0 : index
    %c0_23 = arith.constant 0 : index
    %88 = vector.load %arg8[%c0_22, %c0_23] : memref<8x128xf32, #tpu.memory_space<vmem>>, vector<8x128xf32>
    %89 = vector.broadcast %87 : vector<8x1xf32> to vector<8x128xf32>
    %90 = vector.broadcast %82 : vector<1x128xf32> to vector<8x128xf32>
    %91 = arith.mulf %89, %90 : vector<8x128xf32>
    %92 = arith.addf %88, %91 : vector<8x128xf32>
    %c0_24 = arith.constant 0 : index
    %c0_25 = arith.constant 0 : index
    %93 = vector.load %arg8[%c0_24, %c0_25] : memref<8x128xf32, #tpu.memory_space<vmem>>, vector<8x128xf32>
    tpu.vector_store %arg8[%c0_24, %c0_25], %92 {strides = array<i32>} : memref<8x128xf32, #tpu.memory_space<vmem>>, vector<8x128xf32>,
    %c5_i32 = arith.constant 5 : i32
    %94 = arith.addi %3, %c5_i32 : i32
    %95 = arith.index_cast %94 : i32 to index
    %96 = memref.load %arg1[%95] : memref<8xi32, #tpu.memory_space<smem>>
    %97 = arith.index_cast %94 : i32 to index
    %98 = memref.load %arg2[%97] : memref<8xi32, #tpu.memory_space<smem>>
    %99 = arith.index_cast %96 : i32 to index
    %c0_26 = arith.constant 0 : index
    %100 = vector.load %arg3[%99, %c0_26] : memref<64x128xf32, #tpu.memory_space<vmem>>, vector<1x128xf32>
    %101 = tpu.iota {dimensions = array<i32: 0>} : vector<8x1xi32>
    %102 = vector.broadcast %98 : i32 to vector<8x1xi32>
    %103 = arith.cmpi eq, %101, %102 : vector<8x1xi32>
    %104 = arith.extui %103 : vector<8x1xi1> to vector<8x1xi32>
    %105 = arith.sitofp %104 : vector<8x1xi32> to vector<8x1xf32>
    %c0_27 = arith.constant 0 : index
    %c0_28 = arith.constant 0 : index
    %106 = vector.load %arg8[%c0_27, %c0_28] : memref<8x128xf32, #tpu.memory_space<vmem>>, vector<8x128xf32>
    %107 = vector.broadcast %105 : vector<8x1xf32> to vector<8x128xf32>
    %108 = vector.broadcast %100 : vector<1x128xf32> to vector<8x128xf32>
    %109 = arith.mulf %107, %108 : vector<8x128xf32>
    %110 = arith.addf %106, %109 : vector<8x128xf32>
    %c0_29 = arith.constant 0 : index
    %c0_30 = arith.constant 0 : index
    %111 = vector.load %arg8[%c0_29, %c0_30] : memref<8x128xf32, #tpu.memory_space<vmem>>, vector<8x128xf32>
    tpu.vector_store %arg8[%c0_29, %c0_30], %110 {strides = array<i32>} : memref<8x128xf32, #tpu.memory_space<vmem>>, vector<8x128xf32>,
    %c6_i32 = arith.constant 6 : i32
    %112 = arith.addi %3, %c6_i32 : i32
    %113 = arith.index_cast %112 : i32 to index
    %114 = memref.load %arg1[%113] : memref<8xi32, #tpu.memory_space<smem>>
    %115 = arith.index_cast %112 : i32 to index
    %116 = memref.load %arg2[%115] : memref<8xi32, #tpu.memory_space<smem>>
    %117 = arith.index_cast %114 : i32 to index
    %c0_31 = arith.constant 0 : index
    %118 = vector.load %arg3[%117, %c0_31] : memref<64x128xf32, #tpu.memory_space<vmem>>, vector<1x128xf32>
    %119 = tpu.iota {dimensions = array<i32: 0>} : vector<8x1xi32>
    %120 = vector.broadcast %116 : i32 to vector<8x1xi32>
    %121 = arith.cmpi eq, %119, %120 : vector<8x1xi32>
    %122 = arith.extui %121 : vector<8x1xi1> to vector<8x1xi32>
    %123 = arith.sitofp %122 : vector<8x1xi32> to vector<8x1xf32>
    %c0_32 = arith.constant 0 : index
    %c0_33 = arith.constant 0 : index
    %124 = vector.load %arg8[%c0_32, %c0_33] : memref<8x128xf32, #tpu.memory_space<vmem>>, vector<8x128xf32>
    %125 = vector.broadcast %123 : vector<8x1xf32> to vector<8x128xf32>
    %126 = vector.broadcast %118 : vector<1x128xf32> to vector<8x128xf32>
    %127 = arith.mulf %125, %126 : vector<8x128xf32>
    %128 = arith.addf %124, %127 : vector<8x128xf32>
    %c0_34 = arith.constant 0 : index
    %c0_35 = arith.constant 0 : index
    %129 = vector.load %arg8[%c0_34, %c0_35] : memref<8x128xf32, #tpu.memory_space<vmem>>, vector<8x128xf32>
    tpu.vector_store %arg8[%c0_34, %c0_35], %128 {strides = array<i32>} : memref<8x128xf32, #tpu.memory_space<vmem>>, vector<8x128xf32>,
    %c7_i32 = arith.constant 7 : i32
    %130 = arith.addi %3, %c7_i32 : i32
    %131 = arith.index_cast %130 : i32 to index
    %132 = memref.load %arg1[%131] : memref<8xi32, #tpu.memory_space<smem>>
    %133 = arith.index_cast %130 : i32 to index
    %134 = memref.load %arg2[%133] : memref<8xi32, #tpu.memory_space<smem>>
    %135 = arith.index_cast %132 : i32 to index
    %c0_36 = arith.constant 0 : index
    %136 = vector.load %arg3[%135, %c0_36] : memref<64x128xf32, #tpu.memory_space<vmem>>, vector<1x128xf32>
    %137 = tpu.iota {dimensions = array<i32: 0>} : vector<8x1xi32>
    %138 = vector.broadcast %134 : i32 to vector<8x1xi32>
    %139 = arith.cmpi eq, %137, %138 : vector<8x1xi32>
    %140 = arith.extui %139 : vector<8x1xi1> to vector<8x1xi32>
    %141 = arith.sitofp %140 : vector<8x1xi32> to vector<8x1xf32>
    %c0_37 = arith.constant 0 : index
    %c0_38 = arith.constant 0 : index
    %142 = vector.load %arg8[%c0_37, %c0_38] : memref<8x128xf32, #tpu.memory_space<vmem>>, vector<8x128xf32>
    %143 = vector.broadcast %141 : vector<8x1xf32> to vector<8x128xf32>
    %144 = vector.broadcast %136 : vector<1x128xf32> to vector<8x128xf32>
    %145 = arith.mulf %143, %144 : vector<8x128xf32>
    %146 = arith.addf %142, %145 : vector<8x128xf32>
    %c0_39 = arith.constant 0 : index
    %c0_40 = arith.constant 0 : index
    %147 = vector.load %arg8[%c0_39, %c0_40] : memref<8x128xf32, #tpu.memory_space<vmem>>, vector<8x128xf32>
    tpu.vector_store %arg8[%c0_39, %c0_40], %146 {strides = array<i32>} : memref<8x128xf32, #tpu.memory_space<vmem>>, vector<8x128xf32>,
    %c8_i32_41 = arith.constant 8 : i32
    %c0_i32_42 = arith.constant 0 : i32
    %148 = arith.cmpi eq, %arg0, %c0_i32_42 : i32
    %149 = arith.extui %148 : i1 to i32
    %c0_i32_43 = arith.constant 0 : i32
    %150 = arith.cmpi ne, %149, %c0_i32_43 : i32
    scf.if %150 {
      %c0_44 = arith.constant 0 : index
      %c0_45 = arith.constant 0 : index
      %151 = vector.load %arg8[%c0_44, %c0_45] : memref<8x128xf32, #tpu.memory_space<vmem>>, vector<8x128xf32>
      %c0_46 = arith.constant 0 : index
      %c0_47 = arith.constant 0 : index
      %152 = vector.load %arg6[%c0_46, %c0_47] : memref<8x1xf32, #tpu.memory_space<vmem>>, vector<8x1xf32>
      %153 = vector.broadcast %152 : vector<8x1xf32> to vector<8x128xf32>
      %154 = arith.mulf %151, %153 : vector<8x128xf32>
      %c0_48 = arith.constant 0 : index
      %c0_49 = arith.constant 0 : index
      %155 = vector.load %arg4[%c0_48, %c0_49] : memref<128x128xf32, #tpu.memory_space<vmem>>, vector<128x128xf32>
      %cst = arith.constant dense<0.000000e+00> : vector<8x128xf32>
      %156 = tpu.matmul %154, %155, %cst {dimension_numbers = #tpu.dot_dimension_numbers<[1], [0], [0], [1], [0, 0, 1, 1], [], []>} : vector<8x128xf32>, vector<128x128xf32>, vector<8x128xf32> -> vector<8x128xf32>
      %c0_50 = arith.constant 0 : index
      %c0_51 = arith.constant 0 : index
      %157 = vector.load %arg5[%c0_50, %c0_51] : memref<1x128xf32, #tpu.memory_space<vmem>>, vector<1x128xf32>
      %158 = vector.broadcast %157 : vector<1x128xf32> to vector<8x128xf32>
      %159 = arith.addf %156, %158 : vector<8x128xf32>
      %c0_52 = arith.constant 0 : index
      %c0_53 = arith.constant 0 : index
      %160 = vector.load %arg7[%c0_52, %c0_53] : memref<8x128xf32, #tpu.memory_space<vmem>>, vector<8x128xf32>
      tpu.vector_store %arg7[%c0_52, %c0_53], %159 {strides = array<i32>} : memref<8x128xf32, #tpu.memory_space<vmem>>, vector<8x128xf32>,
    } else {
    }
    return
  }
  func.func @transform_0(%arg0: i32, %arg1: memref<8xi32, #tpu.memory_space<smem>>, %arg2: memref<8xi32, #tpu.memory_space<smem>>) -> (i32, i32) {
    %c0_i32 = arith.constant 0 : i32
    %c0_i32_0 = arith.constant 0 : i32
    %c0_i32_1 = arith.constant 0 : i32
    return %c0_i32, %c0_i32_0 : i32, i32
  }
  func.func @transform_1(%arg0: i32, %arg1: memref<8xi32, #tpu.memory_space<smem>>, %arg2: memref<8xi32, #tpu.memory_space<smem>>) -> (i32, i32) {
    %c0_i32 = arith.constant 0 : i32
    %c0_i32_0 = arith.constant 0 : i32
    %c0_i32_1 = arith.constant 0 : i32
    return %c0_i32, %c0_i32_0 : i32, i32
  }
  func.func @transform_2(%arg0: i32, %arg1: memref<8xi32, #tpu.memory_space<smem>>, %arg2: memref<8xi32, #tpu.memory_space<smem>>) -> (i32, i32) {
    %c0_i32 = arith.constant 0 : i32
    %c0_i32_0 = arith.constant 0 : i32
    %c0_i32_1 = arith.constant 0 : i32
    return %c0_i32, %c0_i32_0 : i32, i32
  }
  func.func @transform_3(%arg0: i32, %arg1: memref<8xi32, #tpu.memory_space<smem>>, %arg2: memref<8xi32, #tpu.memory_space<smem>>) -> (i32, i32) {
    %c0_i32 = arith.constant 0 : i32
    %c0_i32_0 = arith.constant 0 : i32
    %c0_i32_1 = arith.constant 0 : i32
    return %c0_i32, %c0_i32_0 : i32, i32
  }
  func.func @transform_4(%arg0: i32, %arg1: memref<8xi32, #tpu.memory_space<smem>>, %arg2: memref<8xi32, #tpu.memory_space<smem>>) -> (i32, i32) {
    %c0_i32 = arith.constant 0 : i32
    %c0_i32_0 = arith.constant 0 : i32
    %c0_i32_1 = arith.constant 0 : i32
    return %c0_i32, %c0_i32_0 : i32, i32
  }
}

</mosaic_0001>

<llo_original>
// kernel: tpu_custom_call.1
$region0: #{tpu_custom_call.1}
  #allocation0 [shape = 'u32[]', space=smem, size = 0x4, offset = 0x4, fixed_abs, tag = 'smem constant byte address 0x4 - core index']
  #allocation1 [shape = 'u32[144,128]{1,0:T(1,128)}', space=vmem, size = 0x12000, scoped, tag = 'internal scratch']
  #allocation2 [shape = 'f32[8,128]{1,0:T(8,128)}', space=vmem, size = 0x1000, scoped, tag = 'scratch operand']
  #allocation3 [shape = 's32[1]{0}', space=sflag, size = 0x4, scoped, tag = 'scoped memory for tpu_custom_call.1']
  #allocation4 [shape = 'u8[512]{0}', space=smem, size = 0x200, scoped, tag = 'prefetched SMEM operand 0']
  #allocation5 [shape = 'u8[512]{0}', space=smem, size = 0x200, scoped, tag = 'prefetched SMEM operand 1']
  %s0 = inlined_call_operand.vmem [shape: s32[8], index: 0, kind: input, shape index: {}]
  %s1 = inlined_call_operand.vmem [shape: s32[8], index: 1, kind: input, shape index: {}]
  %s2 = inlined_call_operand.hbm [shape: f32[64,128], index: 2, kind: input, shape index: {}]
  %s3 = inlined_call_operand.hbm [shape: f32[128,128], index: 3, kind: input, shape index: {}]
  %s4 = inlined_call_operand.vmem [shape: f32[1,128], index: 4, kind: input, shape index: {}]
  %s5 = inlined_call_operand.vmem [shape: f32[8,1], index: 5, kind: input, shape index: {}]
  %s6 = inlined_call_operand.hbm [shape: f32[8,128], index: 6, kind: output, shape index: {}]
  %s7 = sld [smem:[#allocation0]]
  $region42: #{tpu_custom_call.1} parent=0
    _
  %s9 = ssub.s32 1, %s7
  %s10 = scalar_select 0, %s9, %s7
  %s11 = sshll.u32 %s0, 4
  %s12 = int_to_ptr.vmem [resolvable:$true] %s11
  %14 = dma.vmem_to_smem %s12, 16, [#allocation4], [#allocation3]
  %s15 = sshll.u32 %s1, 4
  %s16 = int_to_ptr.vmem [resolvable:$true] %s15
  %18 = dma.vmem_to_smem %s16, 16, [#allocation5], [#allocation3]
  %19 = dma.done [#allocation3], 32
  %20 = sfence
  $region1: #{tpu_custom_call.1} parent=0
    #allocation6 [shape = 'u8[32768]{0}', space=vmem, size = 0x8000, scoped, tag = 'input window, operand 2, single buffered']
    #allocation7 [shape = 's32[1]{0}', space=sflag, size = 0x4, scoped, tag = 'scoped memory for tpu_custom_call.1']
    #allocation8 [shape = 's32[1]{0}', space=sflag, size = 0x4, scoped, tag = 'scoped memory for tpu_custom_call.1']
    #allocation9 [shape = 'u8[65536]{0}', space=vmem, size = 0x10000, scoped, tag = 'input window, operand 3, single buffered']
    #allocation10 [shape = 's32[1]{0}', space=sflag, size = 0x4, scoped, tag = 'scoped memory for tpu_custom_call.1']
    #allocation11 [shape = 'u8[4096]{0}', space=vmem, size = 0x1000, scoped, tag = 'output window, operand 0, single buffered']
    %21 = vsyncpa [#allocation7], 0
    %22 = vsyncpa [#allocation10], 0
    %23 = vsyncpa [#allocation8], 0
    // Predicated region
    $region2: #{tpu_custom_call.1} parent=1 // pred_check
      _
    $region3: #{tpu_custom_call.1} parent=1 // pred_check_branch
      %25 = sbr.rel (0) target = $region5
    $region4: #{tpu_custom_call.1} parent=1 // pred_region
      %s27 = ssub.s32 1024, 1024
      %28 = vsyncadd [#allocation7], %s27
      %s29 = sshll.u32 [#allocation6], 4
      %s30 = int_to_ptr.vmem [resolvable:$true] %s29
      %35 = dma.hbm_to_vmem [thread:$0]  %s2, 1024, %s30, [#allocation7], 128, 128, 8
    $region5: #{tpu_custom_call.1} parent=1 // pred_fallthru
      _
    // Predicated region
    $region6: #{tpu_custom_call.1} parent=1 // pred_check
      _
    $region7: #{tpu_custom_call.1} parent=1 // pred_check_branch
      %37 = sbr.rel (0) target = $region9
    $region8: #{tpu_custom_call.1} parent=1 // pred_region
      %s39 = ssub.s32 2048, 2048
      %40 = vsyncadd [#allocation10], %s39
      %s41 = sshll.u32 [#allocation9], 4
      %s42 = int_to_ptr.vmem [resolvable:$true] %s41
      %47 = dma.hbm_to_vmem [thread:$0]  %s3, 2048, %s42, [#allocation10], 128, 128, 8
    $region9: #{tpu_custom_call.1} parent=1 // pred_fallthru
      _
    // Predicated region
    $region10: #{tpu_custom_call.1} parent=1 // pred_check
      _
    $region11: #{tpu_custom_call.1} parent=1 // pred_check_branch
      %49 = sbr.rel (0) target = $region13
    $region12: #{tpu_custom_call.1} parent=1 // pred_region
      _
    $region13: #{tpu_custom_call.1} parent=1 // pred_fallthru
      _
    // Predicated region
    $region14: #{tpu_custom_call.1} parent=1 // pred_check
      _
    $region15: #{tpu_custom_call.1} parent=1 // pred_check_branch
      %51 = sbr.rel (0) target = $region17
    $region16: #{tpu_custom_call.1} parent=1 // pred_region
      _
    $region17: #{tpu_custom_call.1} parent=1 // pred_fallthru
      _
    // Predicated region
    $region18: #{tpu_custom_call.1} parent=1 // pred_check
      _
    $region19: #{tpu_custom_call.1} parent=1 // pred_check_branch
      %53 = sbr.rel (0) target = $region21
    $region20: #{tpu_custom_call.1} parent=1 // pred_region
      %54 = dma.done [#allocation7], 1024
    $region21: #{tpu_custom_call.1} parent=1 // pred_fallthru
      _
    // Predicated region
    $region22: #{tpu_custom_call.1} parent=1 // pred_check
      _
    $region23: #{tpu_custom_call.1} parent=1 // pred_check_branch
      %56 = sbr.rel (0) target = $region25
    $region24: #{tpu_custom_call.1} parent=1 // pred_region
      %57 = dma.done [#allocation10], 2048
    $region25: #{tpu_custom_call.1} parent=1 // pred_fallthru
      _
    %p58 = scmp.eq.s32.totalorder 0, 0
    // Predicated region
    $region26: #{tpu_custom_call.1} parent=1 // pred_check
      %p59 = pneg %p58
    $region27: #{tpu_custom_call.1} parent=1 // pred_check_branch
      %61 = sbr.rel (%p59) target = $region29
    $region28: #{tpu_custom_call.1} parent=1 // pred_region
      %62 = vst [vmem:[#allocation2] sm:$0xff] 0.0
    $region29: #{tpu_custom_call.1} parent=1 // pred_fallthru
      _
    %s63 = smul.u32 0, 8
    %s64 = sld [smem:[#allocation4 + %s63]]
    %s65 = sld [smem:[#allocation5 + %s63]]
    %s66 = scalar_lea.vmem [#allocation6], %s64
    %v67 = vld [vmem:[%s66] sm:$0x1]
    %v68 = vlaneseq
    %v69 = vshrl.u32 %v68, 7
    %v70 = vstv %s65
    %vm71 = vcmp.eq.s32.totalorder %v69, %v70
    %v72 = vsel %vm71, 1, 0
    %v73 = vcvt.s32.f32 %v72
    %v74 = vld [vmem:[#allocation2] sm:$0xff]
    %v75 = vlaneseq
    %v76 = vshrl.u32 %v75, 7
    %v77 = vsub.s32 0, %v76
    %v78 = vrot.slane %v67, %v77
    %v79 = vmul.f32 %v73, %v78
    %v80 = vadd.f32 %v74, %v79
    %81 = vst [vmem:[#allocation2] sm:$0xff] %v80
    %s82 = sadd.s32 %s63, 1
    %s83 = sld [smem:[#allocation4 + %s82]]
    %s84 = sld [smem:[#allocation5 + %s82]]
    %s85 = scalar_lea.vmem [#allocation6], %s83
    %v86 = vld [vmem:[%s85] sm:$0x1]
    %v87 = vstv %s84
    %vm88 = vcmp.eq.s32.totalorder %v69, %v87
    %v89 = vsel %vm88, 1, 0
    %v90 = vcvt.s32.f32 %v89
    %v91 = vld [vmem:[#allocation2] sm:$0xff]
    %v92 = vlaneseq
    %v93 = vshrl.u32 %v92, 7
    %v94 = vsub.s32 0, %v93
    %v95 = vrot.slane %v86, %v94
    %v96 = vmul.f32 %v90, %v95
    %v97 = vadd.f32 %v91, %v96
    %98 = vst [vmem:[#allocation2] sm:$0xff] %v97
    %s99 = sadd.s32 %s63, 2
    %s100 = sld [smem:[#allocation4 + %s99]]
    %s101 = sld [smem:[#allocation5 + %s99]]
    %s102 = scalar_lea.vmem [#allocation6], %s100
    %v103 = vld [vmem:[%s102] sm:$0x1]
    %v104 = vstv %s101
    %vm105 = vcmp.eq.s32.totalorder %v69, %v104
    %v106 = vsel %vm105, 1, 0
    %v107 = vcvt.s32.f32 %v106
    %v108 = vld [vmem:[#allocation2] sm:$0xff]
    %v109 = vlaneseq
    %v110 = vshrl.u32 %v109, 7
    %v111 = vsub.s32 0, %v110
    %v112 = vrot.slane %v103, %v111
    %v113 = vmul.f32 %v107, %v112
    %v114 = vadd.f32 %v108, %v113
    %115 = vst [vmem:[#allocation2] sm:$0xff] %v114
    %s116 = sadd.s32 %s63, 3
    %s117 = sld [smem:[#allocation4 + %s116]]
    %s118 = sld [smem:[#allocation5 + %s116]]
    %s119 = scalar_lea.vmem [#allocation6], %s117
    %v120 = vld [vmem:[%s119] sm:$0x1]
    %v121 = vstv %s118
    %vm122 = vcmp.eq.s32.totalorder %v69, %v121
    %v123 = vsel %vm122, 1, 0
    %v124 = vcvt.s32.f32 %v123
    %v125 = vld [vmem:[#allocation2] sm:$0xff]
    %v126 = vlaneseq
    %v127 = vshrl.u32 %v126, 7
    %v128 = vsub.s32 0, %v127
    %v129 = vrot.slane %v120, %v128
    %v130 = vmul.f32 %v124, %v129
    %v131 = vadd.f32 %v125, %v130
    %132 = vst [vmem:[#allocation2] sm:$0xff] %v131
    %s133 = sadd.s32 %s63, 4
    %s134 = sld [smem:[#allocation4 + %s133]]
    %s135 = sld [smem:[#allocation5 + %s133]]
    %s136 = scalar_lea.vmem [#allocation6], %s134
    %v137 = vld [vmem:[%s136] sm:$0x1]
    %v138 = vstv %s135
    %vm139 = vcmp.eq.s32.totalorder %v69, %v138
    %v140 = vsel %vm139, 1, 0
    %v141 = vcvt.s32.f32 %v140
    %v142 = vld [vmem:[#allocation2] sm:$0xff]
    %v143 = vlaneseq
    %v144 = vshrl.u32 %v143, 7
    %v145 = vsub.s32 0, %v144
    %v146 = vrot.slane %v137, %v145
    %v147 = vmul.f32 %v141, %v146
    %v148 = vadd.f32 %v142, %v147
    %149 = vst [vmem:[#allocation2] sm:$0xff] %v148
    %s150 = sadd.s32 %s63, 5
    %s151 = sld [smem:[#allocation4 + %s150]]
    %s152 = sld [smem:[#allocation5 + %s150]]
    %s153 = scalar_lea.vmem [#allocation6], %s151
    %v154 = vld [vmem:[%s153] sm:$0x1]
    %v155 = vstv %s152
    %vm156 = vcmp.eq.s32.totalorder %v69, %v155
    %v157 = vsel %vm156, 1, 0
    %v158 = vcvt.s32.f32 %v157
    %v159 = vld [vmem:[#allocation2] sm:$0xff]
    %v160 = vlaneseq
    %v161 = vshrl.u32 %v160, 7
    %v162 = vsub.s32 0, %v161
    %v163 = vrot.slane %v154, %v162
    %v164 = vmul.f32 %v158, %v163
    %v165 = vadd.f32 %v159, %v164
    %166 = vst [vmem:[#allocation2] sm:$0xff] %v165
    %s167 = sadd.s32 %s63, 6
    %s168 = sld [smem:[#allocation4 + %s167]]
    %s169 = sld [smem:[#allocation5 + %s167]]
    %s170 = scalar_lea.vmem [#allocation6], %s168
    %v171 = vld [vmem:[%s170] sm:$0x1]
    %v172 = vstv %s169
    %vm173 = vcmp.eq.s32.totalorder %v69, %v172
    %v174 = vsel %vm173, 1, 0
    %v175 = vcvt.s32.f32 %v174
    %v176 = vld [vmem:[#allocation2] sm:$0xff]
    %v177 = vlaneseq
    %v178 = vshrl.u32 %v177, 7
    %v179 = vsub.s32 0, %v178
    %v180 = vrot.slane %v171, %v179
    %v181 = vmul.f32 %v175, %v180
    %v182 = vadd.f32 %v176, %v181
    %183 = vst [vmem:[#allocation2] sm:$0xff] %v182
    %s184 = sadd.s32 %s63, 7
    %s185 = sld [smem:[#allocation4 + %s184]]
    %s186 = sld [smem:[#allocation5 + %s184]]
    %s187 = scalar_lea.vmem [#allocation6], %s185
    %v188 = vld [vmem:[%s187] sm:$0x1]
    %v189 = vstv %s186
    %vm190 = vcmp.eq.s32.totalorder %v69, %v189
    %v191 = vsel %vm190, 1, 0
    %v192 = vcvt.s32.f32 %v191
    %v193 = vld [vmem:[#allocation2] sm:$0xff]
    %v194 = vlaneseq
    %v195 = vshrl.u32 %v194, 7
    %v196 = vsub.s32 0, %v195
    %v197 = vrot.slane %v188, %v196
    %v198 = vmul.f32 %v192, %v197
    %v199 = vadd.f32 %v193, %v198
    %200 = vst [vmem:[#allocation2] sm:$0xff] %v199
    // Predicated region
    $region30: #{tpu_custom_call.1} parent=1 // pred_check
      %p201 = pneg %p58
    $region31: #{tpu_custom_call.1} parent=1 // pred_check_branch
      %203 = sbr.rel (%p201) target = $region33
    $region32: #{tpu_custom_call.1} parent=1 // pred_region
      %v204 = vld [vmem:[#allocation2] sm:$0xff]
      %v205 = vld [vmem:[%s5] sm:$0xff]
      %207 = vset.pattern.permute.xlu0 0
      %208 = vperm.xlu0 %207, %v205
      %v209 = vpop.permute.xlu0 %208
      %v211 = vmul.f32 %v204, %v209
      %v212 = vld [vmem:[#allocation9] sm:$0xff]
      %v213 = vld [vmem:[#allocation9 + $0x8] sm:$0xff]
      %v214 = vld [vmem:[#allocation9 + $0x10] sm:$0xff]
      %v215 = vld [vmem:[#allocation9 + $0x18] sm:$0xff]
      %v216 = vld [vmem:[#allocation9 + $0x20] sm:$0xff]
      %v217 = vld [vmem:[#allocation9 + $0x28] sm:$0xff]
      %v218 = vld [vmem:[#allocation9 + $0x30] sm:$0xff]
      %v219 = vld [vmem:[#allocation9 + $0x38] sm:$0xff]
      %v220 = vld [vmem:[#allocation9 + $0x40] sm:$0xff]
      %v221 = vld [vmem:[#allocation9 + $0x48] sm:$0xff]
      %v222 = vld [vmem:[#allocation9 + $0x50] sm:$0xff]
      %v223 = vld [vmem:[#allocation9 + $0x58] sm:$0xff]
      %v224 = vld [vmem:[#allocation9 + $0x60] sm:$0xff]
      %v225 = vld [vmem:[#allocation9 + $0x68] sm:$0xff]
      %v226 = vld [vmem:[#allocation9 + $0x70] sm:$0xff]
      %v227 = vld [vmem:[#allocation9 + $0x78] sm:$0xff]
      %v228 = vld [vmem:[%s4] sm:$0x1]
      %v230 = vlaneseq
      %v231 = vshrl.u32 %v230, 7
      %v232 = vsub.s32 0, %v231
      %v233 = vrot.slane %v228, %v232
      %235 = vmatprep.subr.mxu0 0.0
      %236 = vmatpush1.msra.mxu0 %v227
      %237 = vmatprep.subr.mxu0 0.0
      %238 = vmatpush1.msra.mxu0 %v226
      %239 = vmatprep.subr.mxu0 0.0
      %240 = vmatpush1.msra.mxu0 %v225
      %241 = vmatprep.subr.mxu0 0.0
      %242 = vmatpush1.msra.mxu0 %v224
      %243 = vmatprep.subr.mxu0 0.0
      %244 = vmatpush1.msra.mxu0 %v223
      %245 = vmatprep.subr.mxu0 0.0
      %246 = vmatpush1.msra.mxu0 %v222
      %247 = vmatprep.subr.mxu0 0.0
      %248 = vmatpush1.msra.mxu0 %v221
      %249 = vmatprep.subr.mxu0 0.0
      %250 = vmatpush1.msra.mxu0 %v220
      %251 = vmatprep.subr.mxu0 0.0
      %252 = vmatpush1.msra.mxu0 %v219
      %253 = vmatprep.subr.mxu0 0.0
      %254 = vmatpush1.msra.mxu0 %v218
      %255 = vmatprep.subr.mxu0 0.0
      %256 = vmatpush1.msra.mxu0 %v217
      %257 = vmatprep.subr.mxu0 0.0
      %258 = vmatpush1.msra.mxu0 %v216
      %259 = vmatprep.subr.mxu0 0.0
      %260 = vmatpush1.msra.mxu0 %v215
      %261 = vmatprep.subr.mxu0 0.0
      %262 = vmatpush1.msra.mxu0 %v214
      %263 = vmatprep.subr.mxu0 0.0
      %264 = vmatpush1.msra.mxu0 %v213
      %265 = vmatprep.subr.mxu0 0.0
      %266 = vmatpush1.msra.mxu0 %v212
      %267 = vmatprep.subr.mxu0 0.0
      %268 = vmatpush2.msra.mxu0 0.0
      %269 = vmatprep.subr.mxu0 0.0
      %270 = vmatpush2.msra.mxu0 0.0
      %271 = vmatprep.subr.mxu0 0.0
      %272 = vmatpush2.msra.mxu0 0.0
      %273 = vmatprep.subr.mxu0 0.0
      %274 = vmatpush2.msra.mxu0 0.0
      %275 = vmatprep.subr.mxu0 0.0
      %276 = vmatpush2.msra.mxu0 0.0
      %277 = vmatprep.subr.mxu0 0.0
      %278 = vmatpush2.msra.mxu0 0.0
      %279 = vmatprep.subr.mxu0 0.0
      %280 = vmatpush2.msra.mxu0 0.0
      %281 = vmatprep.subr.mxu0 0.0
      %282 = vmatpush2.msra.mxu0 0.0
      %283 = vmatprep.subr.mxu0 0.0
      %284 = vmatpush2.msra.mxu0 0.0
      %285 = vmatprep.subr.mxu0 0.0
      %286 = vmatpush2.msra.mxu0 0.0
      %287 = vmatprep.subr.mxu0 0.0
      %288 = vmatpush2.msra.mxu0 0.0
      %289 = vmatprep.subr.mxu0 0.0
      %290 = vmatpush2.msra.mxu0 0.0
      %291 = vmatprep.subr.mxu0 0.0
      %292 = vmatpush2.msra.mxu0 0.0
      %293 = vmatprep.subr.mxu0 0.0
      %294 = vmatpush2.msra.mxu0 0.0
      %295 = vmatprep.subr.mxu0 0.0
      %296 = vmatpush2.msra.mxu0 0.0
      %297 = vmatprep.subr.mxu0 0.0
      %298 = vmatpush2.msra.mxu0 0.0
      %299 = vmatprep.mubr.f32.mxu0 0.0
      %300 = vmatmul.mubr.f32.gmra.mxu0 %v211
      %v301 = vpop.f32.mrf.mxu0
      %v302 = vadd.f32 %v233, %v301
      %v303 = vpop.f32.mrf.mxu0
      %304 = vdwg.mxu0
      %305 = vst [vmem:[#allocation11] sm:$0xff] %v302
    $region33: #{tpu_custom_call.1} parent=1 // pred_fallthru
      _
    // Predicated region
    $region34: #{tpu_custom_call.1} parent=1 // pred_check
      _
    $region35: #{tpu_custom_call.1} parent=1 // pred_check_branch
      %307 = sbr.rel (0) target = $region37
    $region36: #{tpu_custom_call.1} parent=1 // pred_region
      %s309 = ssub.s32 128, 128
      %310 = vsyncadd [#allocation8], %s309
      %s312 = sshll.u32 [#allocation11], 4
      %s313 = int_to_ptr.vmem [resolvable:$true] %s312
      %315 = dma.vmem_to_hbm [thread:$0]  %s313, 128, %s6, [#allocation8]
    $region37: #{tpu_custom_call.1} parent=1 // pred_fallthru
      _
    // Predicated region
    $region38: #{tpu_custom_call.1} parent=1 // pred_check
      _
    $region39: #{tpu_custom_call.1} parent=1 // pred_check_branch
      %317 = sbr.rel (0) target = $region41
    $region40: #{tpu_custom_call.1} parent=1 // pred_region
      %318 = dma.done [#allocation8], 128
    $region41: #{tpu_custom_call.1} parent=1 // pred_fallthru
      _
    %319 = vsyncpa [#allocation7], 1
    %320 = vsyncpa [#allocation10], 1
    %321 = vsyncpa [#allocation8], 1

</llo_original>
